<compile_context>
chip_gen: v7x
topology: tpu7x:2x2x1
jax: 0.10.0
libtpu: 0.0.40
codegen_flags: <defaults>
</compile_context>

<pallas_src>
import jax
import jax.numpy as jnp
from jax.experimental import pallas as pl
from jax.experimental.pallas import tpu as pltpu

LN_EPS = 1e-5


def gc_block_kernel(x_ref, wmask_ref, w1c_ref, lnc_ref, w2blk_ref, b2c_ref, out_ref):
    # x_ref/out_ref: [Bt, HW, C]   (C on the lane axis)
    # wmask_ref: [1, C]; w1c_ref: [C, 2P]; lnc_ref: [3, 2P] (b1 | gamma | beta)
    # w2blk_ref: [2P, 2C] block-diag(w2_add, w2_mul); b2c_ref: [1, 2C]
    Bt, HW, C = x_ref.shape
    P2 = w1c_ref.shape[1]
    P = P2 // 2

    # ---- spatial attention pooling (conv_mask -> softmax over HW -> weighted sum)
    x = x_ref[...].astype(jnp.float32)                        # [Bt, HW, C]
    wmask = wmask_ref[...].astype(jnp.float32)                # [1, C]
    # broadcast-multiply + lane reduce instead of an M=1 MXU dot
    logits = jnp.sum(x * wmask, axis=-1, keepdims=True)       # [Bt, HW, 1]
    m = jnp.max(logits, axis=1, keepdims=True)                # [Bt, 1, 1]
    e = jnp.exp(logits - m)                                   # [Bt, HW, 1]
    s = jnp.sum(e, axis=1, keepdims=True)                     # [Bt, 1, 1]
    # deferred softmax normalization: normalize the tiny [Bt, C] context row,
    # not the full [Bt, HW] attention map.
    ctx = jnp.sum(x * e, axis=1) / s[:, :, 0]                 # [Bt, C]

    # ---- fused channel_add / channel_mul transforms (one dot per layer) --------
    ln = lnc_ref[...].astype(jnp.float32)                     # [3, 2P]
    b1, gamma, beta = ln[0:1, :], ln[1:2, :], ln[2:3, :]      # each [1, 2P]
    h = jnp.dot(ctx, w1c_ref[...].astype(jnp.float32),
                preferred_element_type=jnp.float32) + b1      # [Bt, 2P]
    # per-branch LayerNorm over P (view the two branches as [Bt, 2, P])
    h3 = h.reshape(Bt, 2, P)
    mu = jnp.mean(h3, axis=-1, keepdims=True)
    var = jnp.mean((h3 - mu) ** 2, axis=-1, keepdims=True)
    hn = ((h3 - mu) * jax.lax.rsqrt(var + LN_EPS)).reshape(Bt, P2)
    hn = jnp.maximum(hn * gamma + beta, 0.0)                  # [Bt, 2P]
    t = jnp.dot(hn, w2blk_ref[...].astype(jnp.float32),
                preferred_element_type=jnp.float32) + b2c_ref[...]   # [Bt, 2C]
    add_term = t[:, :C]                                       # [Bt, C]
    mul_term = jax.nn.sigmoid(t[:, C:])                       # [Bt, C]

    # ---- apply: out = x * sigmoid(channel_mul(ctx)) + channel_add(ctx) ---------
    # (re-read x from VMEM so the big f32 copy isn't kept live in vregs across the
    #  tiny transform phase)
    xa = x_ref[...].astype(jnp.float32)
    out = xa * mul_term[:, None, :] + add_term[:, None, :]
    out_ref[...] = out.astype(out_ref.dtype)


def gc_block(x, params, *, max_block_bytes=2 * 1024 * 1024):
    """x: [B, C, H, W] float32 (NCHW, matching PyTorch). Returns [B, C, H, W]."""
    B, C, H, W = x.shape
    HW = H * W
    P = params["w1_add"].shape[1]

    # NCHW -> [B, HW, C]: lane-dense working layout (layout plumbing only).
    x2 = jnp.transpose(jnp.reshape(x, (B, C, HW)), (0, 2, 1))

    # ---- pack parameters (trace-time, outside the kernel) ----
    wmask = params["wmask"]                                               # [1, C]
    # conv_mask bias adds the same constant to every logit -> cancels in softmax,
    # so it is intentionally not passed to the kernel.
    w1c = jnp.concatenate([params["w1_add"], params["w1_mul"]], axis=1)   # [C, 2P]
    lnc = jnp.stack([
        jnp.concatenate([params["b1_add"][0], params["b1_mul"][0]]),
        jnp.concatenate([params["g_add"][0],  params["g_mul"][0]]),
        jnp.concatenate([params["bt_add"][0], params["bt_mul"][0]]),
    ], axis=0)                                                            # [3, 2P]
    zpc = jnp.zeros((P, C), params["w2_add"].dtype)
    w2blk = jnp.concatenate([
        jnp.concatenate([params["w2_add"], zpc], axis=1),
        jnp.concatenate([zpc, params["w2_mul"]], axis=1),
    ], axis=0)                                                            # [2P, 2C]
    b2c = jnp.concatenate([params["b2_add"], params["b2_mul"]], axis=1)   # [1, 2C]

    # ---- batch tiling: biggest Bt (divisor of B) whose block fits the budget,
    # keeping >= 2 grid steps when B >= 2 (megacore / v7x 2-TC sharding). ----
    bytes_per_batch = HW * C * x.dtype.itemsize
    Bt = 1
    for cand in range(B, 0, -1):
        if B % cand != 0:
            continue
        if cand * bytes_per_batch > max_block_bytes:
            continue
        if B >= 2 and B // cand < 2:
            continue
        Bt = cand
        break
    grid = (B // Bt,)
    # NOTE: for very large C*HW (e.g. C=1024, HW=3136 on v7x's 64 MiB VMEM) an
    # HW-tiled online-softmax variant would be needed; blocks here are kept under
    # max_block_bytes so the double-buffered pipeline fits scoped VMEM everywhere.

    param_list = [wmask, w1c, lnc, w2blk, b2c]
    in_specs = [pl.BlockSpec((Bt, HW, C), lambda b: (b, 0, 0))]
    # constant block index -> params stay resident in VMEM across grid steps
    in_specs += [pl.BlockSpec(p.shape, lambda b: (0, 0)) for p in param_list]

    out = pl.pallas_call(
        gc_block_kernel,
        out_shape=jax.ShapeDtypeStruct((B, HW, C), x.dtype),
        grid_spec=pltpu.PrefetchScalarGridSpec(
            num_scalar_prefetch=0,
            grid=grid,
            in_specs=in_specs,
            out_specs=pl.BlockSpec((Bt, HW, C), lambda b: (b, 0, 0)),
        ),
        compiler_params=pltpu.CompilerParams(
            dimension_semantics=("parallel",),
            vmem_limit_bytes=32 * 1024 * 1024,
        ),
    )(x2, *param_list)

    return jnp.reshape(jnp.transpose(out, (0, 2, 1)), (B, C, H, W))


def init_params(key, inplanes, planes, zero_init_last=True):
    """Synthetic init mirroring GCBlock.reset_parameters (conv_mask kaiming fan_in,
    last convs zero-init).  zero_init_last=False randomizes the last convs and the
    LN affine so the correctness test exercises the whole datapath."""
    keys = jax.random.split(key, 12)
    (kmask, k1a, kb1a, k1m, kb1m, k2a, kb2a, k2m, kb2m, kga, kgm, kbm) = keys
    C, P = inplanes, planes

    if zero_init_last:
        w2a, b2a = jnp.zeros((P, C), jnp.float32), jnp.zeros((1, C), jnp.float32)
        w2m, b2m = jnp.zeros((P, C), jnp.float32), jnp.zeros((1, C), jnp.float32)
        g_a, bt_a = jnp.ones((1, P), jnp.float32), jnp.zeros((1, P), jnp.float32)
        g_m, bt_m = jnp.ones((1, P), jnp.float32), jnp.zeros((1, P), jnp.float32)
        bmask = jnp.zeros((1, 1), jnp.float32)
    else:
        w2a = jax.random.normal(k2a, (P, C), jnp.float32) * 0.1
        b2a = jax.random.normal(kb2a, (1, C), jnp.float32) * 0.1
        w2m = jax.random.normal(k2m, (P, C), jnp.float32) * 0.1
        b2m = jax.random.normal(kb2m, (1, C), jnp.float32) * 0.1
        g_a = 1.0 + jax.random.normal(kga, (1, P), jnp.float32) * 0.1
        bt_a = jax.random.normal(kbm, (1, P), jnp.float32) * 0.05
        g_m = 1.0 + jax.random.normal(kgm, (1, P), jnp.float32) * 0.1
        bt_m = jax.random.normal(kgm, (1, P), jnp.float32) * 0.05
        bmask = jnp.full((1, 1), 0.3, jnp.float32)  # cancels in softmax

    return {
        "wmask": jax.random.normal(kmask, (1, C), jnp.float32) * jnp.sqrt(2.0 / C),
        "bmask": bmask,
        "w1_add": jax.random.normal(k1a, (C, P), jnp.float32) * jnp.sqrt(2.0 / C),
        "b1_add": jax.random.normal(kb1a, (1, P), jnp.float32) * 0.01,
        "g_add": g_a, "bt_add": bt_a, "w2_add": w2a, "b2_add": b2a,
        "w1_mul": jax.random.normal(k1m, (C, P), jnp.float32) * jnp.sqrt(2.0 / C),
        "b1_mul": jax.random.normal(kb1m, (1, P), jnp.float32) * 0.01,
        "g_mul": g_m, "bt_mul": bt_m, "w2_mul": w2m, "b2_mul": b2m,
    }


def gc_block_ref(x, p):
    """Pure-JAX reference of GCBlock.forward (pool='att', both fusions)."""
    B, C, H, W = x.shape
    HW = H * W
    x2 = x.reshape(B, C, HW)
    logits = jnp.einsum("oc,bch->boh", p["wmask"], x2) + p["bmask"][0, 0]  # [B,1,HW]
    attn = jax.nn.softmax(logits, axis=-1)
    ctx = jnp.einsum("bch,boh->bc", x2, attn)                               # [B,C]

    def transform(ctx, w1, b1, g, bt, w2, b2):
        h = ctx @ w1 + b1
        mu = jnp.mean(h, axis=-1, keepdims=True)
        var = jnp.mean((h - mu) ** 2, axis=-1, keepdims=True)
        hn = (h - mu) / jnp.sqrt(var + LN_EPS) * g + bt
        hn = jnp.maximum(hn, 0.0)
        return hn @ w2 + b2

    add_t = transform(ctx, p["w1_add"], p["b1_add"], p["g_add"], p["bt_add"],
                      p["w2_add"], p["b2_add"])
    mul_t = jax.nn.sigmoid(transform(ctx, p["w1_mul"], p["b1_mul"], p["g_mul"],
                                     p["bt_mul"], p["w2_mul"], p["b2_mul"]))
    return x * mul_t[:, :, None, None] + add_t[:, :, None, None]


if __name__ == "__main__":
    B, C, H, W = 2, 4, 16, 16
    planes = 8

    key = jax.random.PRNGKey(0)
    kx, kp = jax.random.split(key)
    x = jax.random.normal(kx, (B, C, H, W), jnp.float32)

    # 1) module default init (zero-init last convs, sigmoid(0)=0.5 path)
    params0 = init_params(kp, C, planes, zero_init_last=True)
    out0 = jax.block_until_ready(gc_block(x, params0))
    ref0 = gc_block_ref(x, params0)
    assert out0.shape == (B, C, H, W)
    assert jnp.allclose(out0, ref0, atol=1e-5, rtol=1e-5), "mismatch (default init)"

    # 2) randomized last convs / LN affine / bmask: exercises the full datapath
    params1 = init_params(kp, C, planes, zero_init_last=False)
    out1 = jax.block_until_ready(gc_block(x, params1))
    ref1 = gc_block_ref(x, params1)
    assert jnp.allclose(out1, ref1, atol=1e-5, rtol=1e-5), "mismatch (random init)"

    print("KERNEL_OK")
</pallas_src>

<mosaic_0001>
module attributes {stable_mosaic.version = 11 : i64} {
  func.func @gc_block_kernel(%arg0: i32, %arg1: memref<1x256x4xf32, #tpu.memory_space<vmem>>, %arg2: memref<1x4xf32, #tpu.memory_space<vmem>>, %arg3: memref<4x16xf32, #tpu.memory_space<vmem>>, %arg4: memref<3x16xf32, #tpu.memory_space<vmem>>, %arg5: memref<16x8xf32, #tpu.memory_space<vmem>>, %arg6: memref<1x8xf32, #tpu.memory_space<vmem>>, %arg7: memref<1x256x4xf32, #tpu.memory_space<vmem>>) attributes {dimension_semantics = [#tpu.dimension_semantics<parallel>], iteration_bounds = array<i64: 2>, scalar_prefetch = 0 : i64, scratch_operands = 0 : i64, tpu.core_type = #tpu.core_type<tc>, window_params = [{transform_indices = @transform_0, window_bounds = array<i64: 1, 256, 4>}, {pipeline_mode = #tpu.pipeline_mode<synchronous>, transform_indices = @transform_1, window_bounds = array<i64: 1, 4>}, {pipeline_mode = #tpu.pipeline_mode<synchronous>, transform_indices = @transform_2, window_bounds = array<i64: 4, 16>}, {pipeline_mode = #tpu.pipeline_mode<synchronous>, transform_indices = @transform_3, window_bounds = array<i64: 3, 16>}, {pipeline_mode = #tpu.pipeline_mode<synchronous>, transform_indices = @transform_4, window_bounds = array<i64: 16, 8>}, {pipeline_mode = #tpu.pipeline_mode<synchronous>, transform_indices = @transform_5, window_bounds = array<i64: 1, 8>}, {transform_indices = @transform_6, window_bounds = array<i64: 1, 256, 4>}]} {
    %c0 = arith.constant 0 : index
    %c0_0 = arith.constant 0 : index
    %c0_1 = arith.constant 0 : index
    %0 = vector.load %arg1[%c0, %c0_0, %c0_1] : memref<1x256x4xf32, #tpu.memory_space<vmem>>, vector<1x256x4xf32>
    %c0_2 = arith.constant 0 : index
    %c0_3 = arith.constant 0 : index
    %1 = vector.load %arg2[%c0_2, %c0_3] : memref<1x4xf32, #tpu.memory_space<vmem>>, vector<1x4xf32>
    %2 = vector.shape_cast %1 : vector<1x4xf32> to vector<1x1x4xf32>
    %3 = vector.broadcast %2 : vector<1x1x4xf32> to vector<1x256x4xf32>
    %4 = arith.mulf %0, %3 : vector<1x256x4xf32>
    %cst = arith.constant dense<0.000000e+00> : vector<1x256xf32>
    %5 = vector.multi_reduction <add>, %4, %cst [2] : vector<1x256x4xf32> to vector<1x256xf32>
    %6 = vector.shape_cast %5 : vector<1x256xf32> to vector<1x256x1xf32>
    %cst_4 = arith.constant dense<0xFF800000> : vector<1x1xf32>
    %7 = vector.multi_reduction <maximumf>, %6, %cst_4 [1] : vector<1x256x1xf32> to vector<1x1xf32>
    %8 = vector.shape_cast %7 : vector<1x1xf32> to vector<1x1x1xf32>
    %9 = vector.broadcast %8 : vector<1x1x1xf32> to vector<1x256x1xf32>
    %10 = arith.subf %6, %9 : vector<1x256x1xf32>
    %11 = math.exp %10 : vector<1x256x1xf32>
    %cst_5 = arith.constant dense<0.000000e+00> : vector<1x1xf32>
    %12 = vector.multi_reduction <add>, %11, %cst_5 [1] : vector<1x256x1xf32> to vector<1x1xf32>
    %13 = vector.shape_cast %12 : vector<1x1xf32> to vector<1x1x1xf32>
    %14 = vector.broadcast %11 : vector<1x256x1xf32> to vector<1x256x4xf32>
    %15 = arith.mulf %0, %14 : vector<1x256x4xf32>
    %cst_6 = arith.constant dense<0.000000e+00> : vector<1x4xf32>
    %16 = vector.multi_reduction <add>, %15, %cst_6 [1] : vector<1x256x4xf32> to vector<1x4xf32>
    %17 = vector.shape_cast %13 : vector<1x1x1xf32> to vector<1x1xf32>
    %18 = vector.broadcast %17 : vector<1x1xf32> to vector<1x4xf32>
    %19 = arith.divf %16, %18 : vector<1x4xf32>
    %c0_7 = arith.constant 0 : index
    %c0_8 = arith.constant 0 : index
    %20 = vector.load %arg4[%c0_7, %c0_8] : memref<3x16xf32, #tpu.memory_space<vmem>>, vector<3x16xf32>
    %21 = vector.extract_strided_slice %20 {offsets = [0, 0], sizes = [1, 16], strides = [1, 1]} : vector<3x16xf32> to vector<1x16xf32>
    %22 = vector.extract_strided_slice %20 {offsets = [1, 0], sizes = [1, 16], strides = [1, 1]} : vector<3x16xf32> to vector<1x16xf32>
    %23 = vector.extract_strided_slice %20 {offsets = [2, 0], sizes = [1, 16], strides = [1, 1]} : vector<3x16xf32> to vector<1x16xf32>
    %c0_9 = arith.constant 0 : index
    %c0_10 = arith.constant 0 : index
    %24 = vector.load %arg3[%c0_9, %c0_10] : memref<4x16xf32, #tpu.memory_space<vmem>>, vector<4x16xf32>
    %cst_11 = arith.constant dense<0.000000e+00> : vector<1x16xf32>
    %25 = tpu.matmul %19, %24, %cst_11 {dimension_numbers = #tpu.dot_dimension_numbers<[1], [0], [0], [1], [0, 0, 1, 1], [], []>} : vector<1x4xf32>, vector<4x16xf32>, vector<1x16xf32> -> vector<1x16xf32>
    %26 = arith.addf %25, %21 : vector<1x16xf32>
    %27 = vector.shape_cast %26 : vector<1x16xf32> to vector<1x2x8xf32>
    %cst_12 = arith.constant dense<0.000000e+00> : vector<1x2xf32>
    %28 = vector.multi_reduction <add>, %27, %cst_12 [2] : vector<1x2x8xf32> to vector<1x2xf32>
    %29 = vector.shape_cast %28 : vector<1x2xf32> to vector<1x2x1xf32>
    %cst_13 = arith.constant 8.000000e+00 : f32
    %30 = vector.broadcast %cst_13 : f32 to vector<1x2x1xf32>
    %31 = arith.divf %29, %30 : vector<1x2x1xf32>
    %32 = vector.broadcast %31 : vector<1x2x1xf32> to vector<1x2x8xf32>
    %33 = arith.subf %27, %32 : vector<1x2x8xf32>
    %34 = arith.mulf %33, %33 : vector<1x2x8xf32>
    %cst_14 = arith.constant dense<0.000000e+00> : vector<1x2xf32>
    %35 = vector.multi_reduction <add>, %34, %cst_14 [2] : vector<1x2x8xf32> to vector<1x2xf32>
    %36 = vector.shape_cast %35 : vector<1x2xf32> to vector<1x2x1xf32>
    %cst_15 = arith.constant 8.000000e+00 : f32
    %37 = vector.broadcast %cst_15 : f32 to vector<1x2x1xf32>
    %38 = arith.divf %36, %37 : vector<1x2x1xf32>
    %39 = vector.broadcast %31 : vector<1x2x1xf32> to vector<1x2x8xf32>
    %40 = arith.subf %27, %39 : vector<1x2x8xf32>
    %cst_16 = arith.constant 9.99999974E-6 : f32
    %41 = vector.broadcast %cst_16 : f32 to vector<1x2x1xf32>
    %42 = arith.addf %38, %41 : vector<1x2x1xf32>
    %43 = math.rsqrt %42 : vector<1x2x1xf32>
    %44 = vector.broadcast %43 : vector<1x2x1xf32> to vector<1x2x8xf32>
    %45 = arith.mulf %40, %44 : vector<1x2x8xf32>
    %46 = vector.shape_cast %45 : vector<1x2x8xf32> to vector<1x16xf32>
    %47 = arith.mulf %46, %22 : vector<1x16xf32>
    %48 = arith.addf %47, %23 : vector<1x16xf32>
    %cst_17 = arith.constant 0.000000e+00 : f32
    %49 = vector.broadcast %cst_17 : f32 to vector<1x16xf32>
    %50 = arith.maximumf %48, %49 : vector<1x16xf32>
    %c0_18 = arith.constant 0 : index
    %c0_19 = arith.constant 0 : index
    %51 = vector.load %arg5[%c0_18, %c0_19] : memref<16x8xf32, #tpu.memory_space<vmem>>, vector<16x8xf32>
    %cst_20 = arith.constant dense<0.000000e+00> : vector<1x8xf32>
    %52 = tpu.matmul %50, %51, %cst_20 {dimension_numbers = #tpu.dot_dimension_numbers<[1], [0], [0], [1], [0, 0, 1, 1], [], []>} : vector<1x16xf32>, vector<16x8xf32>, vector<1x8xf32> -> vector<1x8xf32>
    %c0_21 = arith.constant 0 : index
    %c0_22 = arith.constant 0 : index
    %53 = vector.load %arg6[%c0_21, %c0_22] : memref<1x8xf32, #tpu.memory_space<vmem>>, vector<1x8xf32>
    %54 = arith.addf %52, %53 : vector<1x8xf32>
    %55 = vector.extract_strided_slice %54 {offsets = [0, 0], sizes = [1, 4], strides = [1, 1]} : vector<1x8xf32> to vector<1x4xf32>
    %56 = vector.extract_strided_slice %54 {offsets = [0, 4], sizes = [1, 4], strides = [1, 1]} : vector<1x8xf32> to vector<1x4xf32>
    %57 = arith.negf %56 : vector<1x4xf32>
    %58 = math.exp %57 : vector<1x4xf32>
    %cst_23 = arith.constant 1.000000e+00 : f32
    %59 = vector.broadcast %cst_23 : f32 to vector<1x4xf32>
    %60 = arith.addf %59, %58 : vector<1x4xf32>
    %61 = arith.divf %59, %60 : vector<1x4xf32>
    %c0_24 = arith.constant 0 : index
    %c0_25 = arith.constant 0 : index
    %c0_26 = arith.constant 0 : index
    %62 = vector.load %arg1[%c0_24, %c0_25, %c0_26] : memref<1x256x4xf32, #tpu.memory_space<vmem>>, vector<1x256x4xf32>
    %63 = vector.shape_cast %61 : vector<1x4xf32> to vector<1x1x4xf32>
    %64 = vector.broadcast %63 : vector<1x1x4xf32> to vector<1x256x4xf32>
    %65 = arith.mulf %62, %64 : vector<1x256x4xf32>
    %66 = vector.shape_cast %55 : vector<1x4xf32> to vector<1x1x4xf32>
    %67 = vector.broadcast %66 : vector<1x1x4xf32> to vector<1x256x4xf32>
    %68 = arith.addf %65, %67 : vector<1x256x4xf32>
    %c0_27 = arith.constant 0 : index
    %c0_28 = arith.constant 0 : index
    %c0_29 = arith.constant 0 : index
    %69 = vector.load %arg7[%c0_27, %c0_28, %c0_29] : memref<1x256x4xf32, #tpu.memory_space<vmem>>, vector<1x256x4xf32>
    tpu.vector_store %arg7[%c0_27, %c0_28, %c0_29], %68 {strides = array<i32>} : memref<1x256x4xf32, #tpu.memory_space<vmem>>, vector<1x256x4xf32>,
    return
  }
  func.func @transform_0(%arg0: i32) -> (i32, i32, i32) {
    %c0_i32 = arith.constant 0 : i32
    %c0_i32_0 = arith.constant 0 : i32
    %c0_i32_1 = arith.constant 0 : i32
    return %arg0, %c0_i32, %c0_i32_0 : i32, i32, i32
  }
  func.func @transform_1(%arg0: i32) -> (i32, i32) {
    %c0_i32 = arith.constant 0 : i32
    %c0_i32_0 = arith.constant 0 : i32
    %c0_i32_1 = arith.constant 0 : i32
    return %c0_i32, %c0_i32_0 : i32, i32
  }
  func.func @transform_2(%arg0: i32) -> (i32, i32) {
    %c0_i32 = arith.constant 0 : i32
    %c0_i32_0 = arith.constant 0 : i32
    %c0_i32_1 = arith.constant 0 : i32
    return %c0_i32, %c0_i32_0 : i32, i32
  }
  func.func @transform_3(%arg0: i32) -> (i32, i32) {
    %c0_i32 = arith.constant 0 : i32
    %c0_i32_0 = arith.constant 0 : i32
    %c0_i32_1 = arith.constant 0 : i32
    return %c0_i32, %c0_i32_0 : i32, i32
  }
  func.func @transform_4(%arg0: i32) -> (i32, i32) {
    %c0_i32 = arith.constant 0 : i32
    %c0_i32_0 = arith.constant 0 : i32
    %c0_i32_1 = arith.constant 0 : i32
    return %c0_i32, %c0_i32_0 : i32, i32
  }
  func.func @transform_5(%arg0: i32) -> (i32, i32) {
    %c0_i32 = arith.constant 0 : i32
    %c0_i32_0 = arith.constant 0 : i32
    %c0_i32_1 = arith.constant 0 : i32
    return %c0_i32, %c0_i32_0 : i32, i32
  }
  func.func @transform_6(%arg0: i32) -> (i32, i32, i32) {
    %c0_i32 = arith.constant 0 : i32
    %c0_i32_0 = arith.constant 0 : i32
    %c0_i32_1 = arith.constant 0 : i32
    return %arg0, %c0_i32, %c0_i32_0 : i32, i32, i32
  }
}

</mosaic_0001>

<llo_original>
// kernel: tpu_custom_call.1
$region0: #{tpu_custom_call.1}
  #allocation0 [shape = 'u32[]', space=smem, size = 0x4, offset = 0x4, fixed_abs, tag = 'smem constant byte address 0x4 - core index']
  #allocation1 [shape = 'u32[144,128]{1,0:T(1,128)}', space=vmem, size = 0x12000, scoped, tag = 'internal scratch']
  %s0 = inlined_call_operand.vmem [shape: f32[2,256,4], index: 0, kind: input, shape index: {}]
  %s1 = inlined_call_operand.vmem [shape: f32[1,4], index: 1, kind: input, shape index: {}]
  %s2 = inlined_call_operand.vmem [shape: f32[4,16], index: 2, kind: input, shape index: {}]
  %s3 = inlined_call_operand.vmem [shape: f32[3,16], index: 3, kind: input, shape index: {}]
  %s4 = inlined_call_operand.vmem [shape: f32[16,8], index: 4, kind: input, shape index: {}]
  %s5 = inlined_call_operand.vmem [shape: f32[1,8], index: 5, kind: input, shape index: {}]
  %s6 = inlined_call_operand.vmem [shape: f32[2,256,4], index: 6, kind: output, shape index: {}]
  %s7 = sld [smem:[#allocation0]]
  $region57: #{tpu_custom_call.1} parent=0
    _
  %s9 = ssub.s32 1, %s7
  %s10 = scalar_select 0, %s9, %s7
  loop: start=0, step=1, limit=4
  $region2: #{tpu_custom_call.1} parent=0 // loop_pre_header
    _
  $region3: #{tpu_custom_call.1} parent=0 // loop_header
    %s12 = sphi 0, %s16
    %p13 = scmp.ge.s32.totalorder %s12, 4
    %s22 = sphi 0, %s24
    %s25 = sphi 0, %s22
    %s26 = sphi 0, %s25
    %s42 = sphi 0, %s26
    %s46 = sphi 0, %s46
    %s48 = sphi 0, %s46
    %s49 = sphi 0, %s48
    %s63 = sphi 0, %s49
    %s67 = sphi 0, %s67
    %s69 = sphi 0, %s67
    %s70 = sphi 0, %s69
    %s84 = sphi 0, %s70
    %s88 = sphi 0, %s88
    %s90 = sphi 0, %s88
    %s91 = sphi 0, %s90
    %s105 = sphi 0, %s91
    %s109 = sphi 0, %s109
    %s111 = sphi 0, %s109
    %s112 = sphi 0, %s111
    %s126 = sphi 0, %s112
    %s130 = sphi 0, %s130
    %s132 = sphi 0, %s130
    %s133 = sphi 0, %s132
    %s147 = sphi 0, %s133
    %s153 = sphi 0, %s155
    %s156 = sphi 0, %s153
    %s157 = sphi 0, %s156
    %s173 = sphi 0, %s157
  $region4: #{tpu_custom_call.1} parent=0 // loop_header_branch
    %15 = sbr.rel (%p13) target = $region8
  $region5: #{tpu_custom_call.1} parent=0 // loop_body
    %s17 = ssub.s32 %s12, 1
    %s18 = ssub.s32 %s12, 2
    %s19 = sadd.s32 %s12, 1
    %s20 = ssub.s32 %s12, %s19
    %p21 = scmp.eq.s32.totalorder %s20, 0
    %s23 = sadd.s32 %s22, 1
    %s24 = scalar_select %p21, %s22, %s23
    %p27 = pneg %p21
    %p28 = scmp.eq.s32.totalorder %s12, 1
    %p29 = por %p27, %p28
    %p30 = scmp.ne.s32.totalorder %s22, %s25
    %p31 = scmp.eq.s32.totalorder %s12, 0
    %p32 = por %p30, %p31
    %p33 = scmp.ne.s32.totalorder %s22, %s25
    %p34 = scmp.eq.s32.totalorder %s17, 1
    %p35 = por %p33, %p34
    %p36 = scmp.ne.s32.totalorder %s25, %s26
    %p37 = scmp.eq.s32.totalorder %s17, 0
    %p38 = por %p36, %p37
    %p39 = scmp.ne.s32.totalorder %s25, %s26
    %p40 = scmp.eq.s32.totalorder %s18, 1
    %p41 = por %p39, %p40
    %p43 = scmp.ne.s32.totalorder %s26, %s42
    %p44 = scmp.eq.s32.totalorder %s18, 0
    %p45 = por %p43, %p44
    %s47 = sadd.s32 %s46, 1
    %p50 = scmp.eq.s32.totalorder %s12, 1
    %p51 = scmp.ne.s32.totalorder %s46, %s48
    %p52 = scmp.eq.s32.totalorder %s12, 0
    %p53 = por %p51, %p52
    %p54 = scmp.ne.s32.totalorder %s46, %s48
    %p55 = scmp.eq.s32.totalorder %s17, 1
    %p56 = por %p54, %p55
    %p57 = scmp.ne.s32.totalorder %s48, %s49
    %p58 = scmp.eq.s32.totalorder %s17, 0
    %p59 = por %p57, %p58
    %p60 = scmp.ne.s32.totalorder %s48, %s49
    %p61 = scmp.eq.s32.totalorder %s18, 1
    %p62 = por %p60, %p61
    %p64 = scmp.ne.s32.totalorder %s49, %s63
    %p65 = scmp.eq.s32.totalorder %s18, 0
    %p66 = por %p64, %p65
    %s68 = sadd.s32 %s67, 1
    %p71 = scmp.eq.s32.totalorder %s12, 1
    %p72 = scmp.ne.s32.totalorder %s67, %s69
    %p73 = scmp.eq.s32.totalorder %s12, 0
    %p74 = por %p72, %p73
    %p75 = scmp.ne.s32.totalorder %s67, %s69
    %p76 = scmp.eq.s32.totalorder %s17, 1
    %p77 = por %p75, %p76
    %p78 = scmp.ne.s32.totalorder %s69, %s70
    %p79 = scmp.eq.s32.totalorder %s17, 0
    %p80 = por %p78, %p79
    %p81 = scmp.ne.s32.totalorder %s69, %s70
    %p82 = scmp.eq.s32.totalorder %s18, 1
    %p83 = por %p81, %p82
    %p85 = scmp.ne.s32.totalorder %s70, %s84
    %p86 = scmp.eq.s32.totalorder %s18, 0
    %p87 = por %p85, %p86
    %s89 = sadd.s32 %s88, 1
    %p92 = scmp.eq.s32.totalorder %s12, 1
    %p93 = scmp.ne.s32.totalorder %s88, %s90
    %p94 = scmp.eq.s32.totalorder %s12, 0
    %p95 = por %p93, %p94
    %p96 = scmp.ne.s32.totalorder %s88, %s90
    %p97 = scmp.eq.s32.totalorder %s17, 1
    %p98 = por %p96, %p97
    %p99 = scmp.ne.s32.totalorder %s90, %s91
    %p100 = scmp.eq.s32.totalorder %s17, 0
    %p101 = por %p99, %p100
    %p102 = scmp.ne.s32.totalorder %s90, %s91
    %p103 = scmp.eq.s32.totalorder %s18, 1
    %p104 = por %p102, %p103
    %p106 = scmp.ne.s32.totalorder %s91, %s105
    %p107 = scmp.eq.s32.totalorder %s18, 0
    %p108 = por %p106, %p107
    %s110 = sadd.s32 %s109, 1
    %p113 = scmp.eq.s32.totalorder %s12, 1
    %p114 = scmp.ne.s32.totalorder %s109, %s111
    %p115 = scmp.eq.s32.totalorder %s12, 0
    %p116 = por %p114, %p115
    %p117 = scmp.ne.s32.totalorder %s109, %s111
    %p118 = scmp.eq.s32.totalorder %s17, 1
    %p119 = por %p117, %p118
    %p120 = scmp.ne.s32.totalorder %s111, %s112
    %p121 = scmp.eq.s32.totalorder %s17, 0
    %p122 = por %p120, %p121
    %p123 = scmp.ne.s32.totalorder %s111, %s112
    %p124 = scmp.eq.s32.totalorder %s18, 1
    %p125 = por %p123, %p124
    %p127 = scmp.ne.s32.totalorder %s112, %s126
    %p128 = scmp.eq.s32.totalorder %s18, 0
    %p129 = por %p127, %p128
    %s131 = sadd.s32 %s130, 1
    %p134 = scmp.eq.s32.totalorder %s12, 1
    %p135 = scmp.ne.s32.totalorder %s130, %s132
    %p136 = scmp.eq.s32.totalorder %s12, 0
    %p137 = por %p135, %p136
    %p138 = scmp.ne.s32.totalorder %s130, %s132
    %p139 = scmp.eq.s32.totalorder %s17, 1
    %p140 = por %p138, %p139
    %p141 = scmp.ne.s32.totalorder %s132, %s133
    %p142 = scmp.eq.s32.totalorder %s17, 0
    %p143 = por %p141, %p142
    %p144 = scmp.ne.s32.totalorder %s132, %s133
    %p145 = scmp.eq.s32.totalorder %s18, 1
    %p146 = por %p144, %p145
    %p148 = scmp.ne.s32.totalorder %s133, %s147
    %p149 = scmp.eq.s32.totalorder %s18, 0
    %p150 = por %p148, %p149
    %s151 = ssub.s32 %s12, %s19
    %p152 = scmp.eq.s32.totalorder %s151, 0
    %s154 = sadd.s32 %s153, 1
    %s155 = scalar_select %p152, %s153, %s154
    %p158 = pneg %p152
    %p159 = scmp.eq.s32.totalorder %s12, 1
    %p160 = por %p158, %p159
    %p161 = scmp.ne.s32.totalorder %s153, %s156
    %p162 = scmp.eq.s32.totalorder %s12, 0
    %p163 = por %p161, %p162
    %p164 = scmp.ne.s32.totalorder %s153, %s156
    %p165 = scmp.eq.s32.totalorder %s17, 1
    %p166 = por %p164, %p165
    %p167 = scmp.ne.s32.totalorder %s156, %s157
    %p168 = scmp.eq.s32.totalorder %s17, 0
    %p169 = por %p167, %p168
    %p170 = scmp.ne.s32.totalorder %s156, %s157
    %p171 = scmp.eq.s32.totalorder %s18, 1
    %p172 = por %p170, %p171
    %p174 = scmp.ne.s32.totalorder %s157, %s173
    %p175 = scmp.eq.s32.totalorder %s18, 0
    %p176 = por %p174, %p175
    %p177 = scmp.le.s32.totalorder 1, %s12
    %p178 = scmp.lt.s32.totalorder %s12, 3
    %p179 = pnand %p177, %p178
    %p180 = pneg %p179
    // Predicated region
    $region9: #{tpu_custom_call.1} parent=5 // pred_check
      _
    $region10: #{tpu_custom_call.1} parent=5 // pred_check_branch
      %182 = sbr.rel (%p179) target = $region12
    $region11: #{tpu_custom_call.1} parent=5 // pred_region
      %s183 = ssub.s32 %s12, 1
      // Predicated region
      $region13: #{tpu_custom_call.1} parent=11 // pred_check
        %p184 = pneg %p59
      $region14: #{tpu_custom_call.1} parent=11 // pred_check_branch
        %186 = sbr.rel (%p184) target = $region16
      $region15: #{tpu_custom_call.1} parent=11 // pred_region
        _
      $region16: #{tpu_custom_call.1} parent=11 // pred_fallthru
        _
      // Predicated region
      $region17: #{tpu_custom_call.1} parent=11 // pred_check
        %p187 = pneg %p80
      $region18: #{tpu_custom_call.1} parent=11 // pred_check_branch
        %189 = sbr.rel (%p187) target = $region20
      $region19: #{tpu_custom_call.1} parent=11 // pred_region
        _
      $region20: #{tpu_custom_call.1} parent=11 // pred_fallthru
        _
      // Predicated region
      $region21: #{tpu_custom_call.1} parent=11 // pred_check
        %p190 = pneg %p101
      $region22: #{tpu_custom_call.1} parent=11 // pred_check_branch
        %192 = sbr.rel (%p190) target = $region24
      $region23: #{tpu_custom_call.1} parent=11 // pred_region
        _
      $region24: #{tpu_custom_call.1} parent=11 // pred_fallthru
        _
      // Predicated region
      $region25: #{tpu_custom_call.1} parent=11 // pred_check
        %p193 = pneg %p122
      $region26: #{tpu_custom_call.1} parent=11 // pred_check_branch
        %195 = sbr.rel (%p193) target = $region28
      $region27: #{tpu_custom_call.1} parent=11 // pred_region
        _
      $region28: #{tpu_custom_call.1} parent=11 // pred_fallthru
        _
      // Predicated region
      $region29: #{tpu_custom_call.1} parent=11 // pred_check
        %p196 = pneg %p143
      $region30: #{tpu_custom_call.1} parent=11 // pred_check_branch
        %198 = sbr.rel (%p196) target = $region32
      $region31: #{tpu_custom_call.1} parent=11 // pred_region
        _
      $region32: #{tpu_custom_call.1} parent=11 // pred_fallthru
        _
    $region12: #{tpu_custom_call.1} parent=5 // pred_fallthru
      _
    %p199 = scmp.lt.s32.totalorder %s12, 2
    // Predicated region
    $region33: #{tpu_custom_call.1} parent=5 // pred_check
      %p200 = pneg %p199
    $region34: #{tpu_custom_call.1} parent=5 // pred_check_branch
      %202 = sbr.rel (%p200) target = $region36
    $region35: #{tpu_custom_call.1} parent=5 // pred_region
      // Predicated region
      $region37: #{tpu_custom_call.1} parent=35 // pred_check
        %p203 = pneg %p32
      $region38: #{tpu_custom_call.1} parent=35 // pred_check_branch
        %205 = sbr.rel (%p203) target = $region40
      $region39: #{tpu_custom_call.1} parent=35 // pred_region
        %p206 = scmp.lt.s32.totalorder %s12, 1
        %s207 = scalar_select %p206, %s12, 1
        %s208 = smul.addr %s207, 32
        %s209 = smul.addr %s208, 8
        %s210 = scalar_lea.vmem %s0, %s209
      $region40: #{tpu_custom_call.1} parent=35 // pred_fallthru
        _
    $region36: #{tpu_custom_call.1} parent=5 // pred_fallthru
      _
    %p211 = scmp.le.s32.totalorder 1, %s12
    %p212 = scmp.lt.s32.totalorder %s12, 3
    %p213 = pnand %p211, %p212
    %p214 = pneg %p213
    // Predicated region
    $region41: #{tpu_custom_call.1} parent=5 // pred_check
      _
    $region42: #{tpu_custom_call.1} parent=5 // pred_check_branch
      %216 = sbr.rel (%p213) target = $region44
    $region43: #{tpu_custom_call.1} parent=5 // pred_region
      %s217 = ssub.s32 %s12, 1
      %p218 = scmp.lt.s32.totalorder %s17, 1
      %s219 = scalar_select %p218, %s17, 1
      %s220 = smul.addr %s219, 32
      %s221 = smul.addr %s220, 8
      %s222 = scalar_lea.vmem %s0, %s221
      %p223 = pneg %p38
      %p224 = pneg %p35
      %p225 = pneg %p59
      %p226 = pneg %p56
      %p227 = pneg %p80
      %p228 = pneg %p77
      %p229 = pneg %p101
      %p230 = pneg %p98
      %p231 = pneg %p122
      %p232 = pneg %p119
      %p233 = pneg %p143
      %p234 = pneg %p140
      %p235 = pneg %p169
      %p236 = pneg %p166
      %p237 = scmp.lt.s32.totalorder %s17, 1
      %s238 = scalar_select %p237, %s17, 1
      %s239 = smul.addr %s238, 32
      %s240 = smul.addr %s239, 8
      %s241 = scalar_lea.vmem %s6, %s240
      %p242 = scmp.lt.s32.totalorder %s17, 1
      %s243 = scalar_select %p242, %s17, 1
      %s244 = smul.addr %s243, 32
      %s245 = smul.addr %s244, 8
      %s246 = scalar_lea.vmem %s0, %s245
      %p247 = scmp.lt.s32.totalorder %s17, 1
      %s248 = scalar_select %p247, %s17, 1
      %s249 = smul.addr %s248, 32
      %s250 = smul.addr %s249, 8
      %s251 = scalar_lea.vmem %s6, %s250
      %v252 = vld [vmem:[%s246] sm:$0xff]
      %v253 = vld [vmem:[%s246 + $0x8] sm:$0xff]
      %v254 = vld [vmem:[%s246 + $0x10] sm:$0xff]
      %v255 = vld [vmem:[%s246 + $0x18] sm:$0xff]
      %v256 = vld [vmem:[%s246 + $0x20] sm:$0xff]
      %v257 = vld [vmem:[%s246 + $0x28] sm:$0xff]
      %v258 = vld [vmem:[%s246 + $0x30] sm:$0xff]
      %v259 = vld [vmem:[%s246 + $0x38] sm:$0xff]
      %v260 = vld [vmem:[%s246 + $0x40] sm:$0xff]
      %v261 = vld [vmem:[%s246 + $0x48] sm:$0xff]
      %v262 = vld [vmem:[%s246 + $0x50] sm:$0xff]
      %v263 = vld [vmem:[%s246 + $0x58] sm:$0xff]
      %v264 = vld [vmem:[%s246 + $0x60] sm:$0xff]
      %v265 = vld [vmem:[%s246 + $0x68] sm:$0xff]
      %v266 = vld [vmem:[%s246 + $0x70] sm:$0xff]
      %v267 = vld [vmem:[%s246 + $0x78] sm:$0xff]
      %v268 = vld [vmem:[%s246 + $0x80] sm:$0xff]
      %v269 = vld [vmem:[%s246 + $0x88] sm:$0xff]
      %v270 = vld [vmem:[%s246 + $0x90] sm:$0xff]
      %v271 = vld [vmem:[%s246 + $0x98] sm:$0xff]
      %v272 = vld [vmem:[%s246 + $0xa0] sm:$0xff]
      %v273 = vld [vmem:[%s246 + $0xa8] sm:$0xff]
      %v274 = vld [vmem:[%s246 + $0xb0] sm:$0xff]
      %v275 = vld [vmem:[%s246 + $0xb8] sm:$0xff]
      %v276 = vld [vmem:[%s246 + $0xc0] sm:$0xff]
      %v277 = vld [vmem:[%s246 + $0xc8] sm:$0xff]
      %v278 = vld [vmem:[%s246 + $0xd0] sm:$0xff]
      %v279 = vld [vmem:[%s246 + $0xd8] sm:$0xff]
      %v280 = vld [vmem:[%s246 + $0xe0] sm:$0xff]
      %v281 = vld [vmem:[%s246 + $0xe8] sm:$0xff]
      %v282 = vld [vmem:[%s246 + $0xf0] sm:$0xff]
      %v283 = vld [vmem:[%s246 + $0xf8] sm:$0xff]
      %v284 = vld [vmem:[%s1] sm:$0x1]
      %v286 = vlaneseq
      %v287 = vshrl.u32 %v286, 7
      %v288 = vsub.s32 0, %v287
      %v289 = vrot.slane %v284, %v288
      %v291 = vmul.f32 %v252, %v289
      %v292 = vmul.f32 %v253, %v289
      %v293 = vmul.f32 %v254, %v289
      %v294 = vmul.f32 %v255, %v289
      %v295 = vmul.f32 %v256, %v289
      %v296 = vmul.f32 %v257, %v289
      %v297 = vmul.f32 %v258, %v289
      %v298 = vmul.f32 %v259, %v289
      %v299 = vmul.f32 %v260, %v289
      %v300 = vmul.f32 %v261, %v289
      %v301 = vmul.f32 %v262, %v289
      %v302 = vmul.f32 %v263, %v289
      %v303 = vmul.f32 %v264, %v289
      %v304 = vmul.f32 %v265, %v289
      %v305 = vmul.f32 %v266, %v289
      %v306 = vmul.f32 %v267, %v289
      %v307 = vmul.f32 %v268, %v289
      %v308 = vmul.f32 %v269, %v289
      %v309 = vmul.f32 %v270, %v289
      %v310 = vmul.f32 %v271, %v289
      %v311 = vmul.f32 %v272, %v289
      %v312 = vmul.f32 %v273, %v289
      %v313 = vmul.f32 %v274, %v289
      %v314 = vmul.f32 %v275, %v289
      %v315 = vmul.f32 %v276, %v289
      %v316 = vmul.f32 %v277, %v289
      %v317 = vmul.f32 %v278, %v289
      %v318 = vmul.f32 %v279, %v289
      %v319 = vmul.f32 %v280, %v289
      %v320 = vmul.f32 %v281, %v289
      %v321 = vmul.f32 %v282, %v289
      %v322 = vmul.f32 %v283, %v289
      %vm323 = vcmask 31744
      %v324 = vsel %vm323, %v291, 0.0
      %325 = vadd.xlane.f32.xlu0 %v324
      %v326 = vpop.xlane.xlu0 %325
      %v327 = vsel %vm323, %v292, 0.0
      %328 = vadd.xlane.f32.xlu0 %v327
      %v329 = vpop.xlane.xlu0 %328
      %v330 = vsel %vm323, %v293, 0.0
      %331 = vadd.xlane.f32.xlu0 %v330
      %v332 = vpop.xlane.xlu0 %331
      %v333 = vsel %vm323, %v294, 0.0
      %334 = vadd.xlane.f32.xlu0 %v333
      %v335 = vpop.xlane.xlu0 %334
      %v336 = vsel %vm323, %v295, 0.0
      %337 = vadd.xlane.f32.xlu0 %v336
      %v338 = vpop.xlane.xlu0 %337
      %v339 = vsel %vm323, %v296, 0.0
      %340 = vadd.xlane.f32.xlu0 %v339
      %v341 = vpop.xlane.xlu0 %340
      %v342 = vsel %vm323, %v297, 0.0
      %343 = vadd.xlane.f32.xlu0 %v342
      %v344 = vpop.xlane.xlu0 %343
      %v345 = vsel %vm323, %v298, 0.0
      %346 = vadd.xlane.f32.xlu0 %v345
      %v347 = vpop.xlane.xlu0 %346
      %v348 = vsel %vm323, %v299, 0.0
      %349 = vadd.xlane.f32.xlu0 %v348
      %v350 = vpop.xlane.xlu0 %349
      %v351 = vsel %vm323, %v300, 0.0
      %352 = vadd.xlane.f32.xlu0 %v351
      %v353 = vpop.xlane.xlu0 %352
      %v354 = vsel %vm323, %v301, 0.0
      %355 = vadd.xlane.f32.xlu0 %v354
      %v356 = vpop.xlane.xlu0 %355
      %v357 = vsel %vm323, %v302, 0.0
      %358 = vadd.xlane.f32.xlu0 %v357
      %v359 = vpop.xlane.xlu0 %358
      %v360 = vsel %vm323, %v303, 0.0
      %361 = vadd.xlane.f32.xlu0 %v360
      %v362 = vpop.xlane.xlu0 %361
      %v363 = vsel %vm323, %v304, 0.0
      %364 = vadd.xlane.f32.xlu0 %v363
      %v365 = vpop.xlane.xlu0 %364
      %v366 = vsel %vm323, %v305, 0.0
      %367 = vadd.xlane.f32.xlu0 %v366
      %v368 = vpop.xlane.xlu0 %367
      %v369 = vsel %vm323, %v306, 0.0
      %370 = vadd.xlane.f32.xlu0 %v369
      %v371 = vpop.xlane.xlu0 %370
      %v372 = vsel %vm323, %v307, 0.0
      %373 = vadd.xlane.f32.xlu0 %v372
      %v374 = vpop.xlane.xlu0 %373
      %v375 = vsel %vm323, %v308, 0.0
      %376 = vadd.xlane.f32.xlu0 %v375
      %v377 = vpop.xlane.xlu0 %376
      %v378 = vsel %vm323, %v309, 0.0
      %379 = vadd.xlane.f32.xlu0 %v378
      %v380 = vpop.xlane.xlu0 %379
      %v381 = vsel %vm323, %v310, 0.0
      %382 = vadd.xlane.f32.xlu0 %v381
      %v383 = vpop.xlane.xlu0 %382
      %v384 = vsel %vm323, %v311, 0.0
      %385 = vadd.xlane.f32.xlu0 %v384
      %v386 = vpop.xlane.xlu0 %385
      %v387 = vsel %vm323, %v312, 0.0
      %388 = vadd.xlane.f32.xlu0 %v387
      %v389 = vpop.xlane.xlu0 %388
      %v390 = vsel %vm323, %v313, 0.0
      %391 = vadd.xlane.f32.xlu0 %v390
      %v392 = vpop.xlane.xlu0 %391
      %v393 = vsel %vm323, %v314, 0.0
      %394 = vadd.xlane.f32.xlu0 %v393
      %v395 = vpop.xlane.xlu0 %394
      %v396 = vsel %vm323, %v315, 0.0
      %397 = vadd.xlane.f32.xlu0 %v396
      %v398 = vpop.xlane.xlu0 %397
      %v399 = vsel %vm323, %v316, 0.0
      %400 = vadd.xlane.f32.xlu0 %v399
      %v401 = vpop.xlane.xlu0 %400
      %v402 = vsel %vm323, %v317, 0.0
      %403 = vadd.xlane.f32.xlu0 %v402
      %v404 = vpop.xlane.xlu0 %403
      %v405 = vsel %vm323, %v318, 0.0
      %406 = vadd.xlane.f32.xlu0 %v405
      %v407 = vpop.xlane.xlu0 %406
      %v408 = vsel %vm323, %v319, 0.0
      %409 = vadd.xlane.f32.xlu0 %v408
      %v410 = vpop.xlane.xlu0 %409
      %v411 = vsel %vm323, %v320, 0.0
      %412 = vadd.xlane.f32.xlu0 %v411
      %v413 = vpop.xlane.xlu0 %412
      %v414 = vsel %vm323, %v321, 0.0
      %415 = vadd.xlane.f32.xlu0 %v414
      %v416 = vpop.xlane.xlu0 %415
      %v417 = vsel %vm323, %v322, 0.0
      %418 = vadd.xlane.f32.xlu0 %v417
      %v419 = vpop.xlane.xlu0 %418
      %v420 = vmax.f32 %v326, %v338
      %v421 = vmax.f32 %v329, %v341
      %v422 = vmax.f32 %v332, %v344
      %v423 = vmax.f32 %v335, %v347
      %v424 = vmax.f32 %v420, %v350
      %v425 = vmax.f32 %v421, %v353
      %v426 = vmax.f32 %v422, %v356
      %v427 = vmax.f32 %v423, %v359
      %v428 = vmax.f32 %v424, %v362
      %v429 = vmax.f32 %v425, %v365
      %v430 = vmax.f32 %v426, %v368
      %v431 = vmax.f32 %v427, %v371
      %v432 = vmax.f32 %v428, %v374
      %v433 = vmax.f32 %v429, %v377
      %v434 = vmax.f32 %v430, %v380
      %v435 = vmax.f32 %v431, %v383
      %v436 = vmax.f32 %v432, %v386
      %v437 = vmax.f32 %v433, %v389
      %v438 = vmax.f32 %v434, %v392
      %v439 = vmax.f32 %v435, %v395
      %v440 = vmax.f32 %v436, %v398
      %v441 = vmax.f32 %v437, %v401
      %v442 = vmax.f32 %v438, %v404
      %v443 = vmax.f32 %v439, %v407
      %v444 = vmax.f32 %v440, %v410
      %v445 = vmax.f32 %v441, %v413
      %v446 = vmax.f32 %v442, %v416
      %v447 = vmax.f32 %v443, %v419
      %v448 = vmax.f32 %v444, %v445
      %v449 = vmax.f32 %v446, %v447
      %v450 = vmax.f32 %v448, %v449
      %v451 = vrot.slane %v450, 4
      %v452 = vmax.f32 %v450, %v451
      %v453 = vrot.slane %v452, 2
      %v454 = vmax.f32 %v452, %v453
      %v455 = vrot.slane %v454, 1
      %v456 = vmax.f32 %v454, %v455
      %v457 = vsub.f32 %v326, %v456
      %v458 = vsub.f32 %v329, %v456
      %v459 = vsub.f32 %v332, %v456
      %v460 = vsub.f32 %v335, %v456
      %v461 = vsub.f32 %v338, %v456
      %v462 = vsub.f32 %v341, %v456
      %v463 = vsub.f32 %v344, %v456
      %v464 = vsub.f32 %v347, %v456
      %v465 = vsub.f32 %v350, %v456
      %v466 = vsub.f32 %v353, %v456
      %v467 = vsub.f32 %v356, %v456
      %v468 = vsub.f32 %v359, %v456
      %v469 = vsub.f32 %v362, %v456
      %v470 = vsub.f32 %v365, %v456
      %v471 = vsub.f32 %v368, %v456
      %v472 = vsub.f32 %v371, %v456
      %v473 = vsub.f32 %v374, %v456
      %v474 = vsub.f32 %v377, %v456
      %v475 = vsub.f32 %v380, %v456
      %v476 = vsub.f32 %v383, %v456
      %v477 = vsub.f32 %v386, %v456
      %v478 = vsub.f32 %v389, %v456
      %v479 = vsub.f32 %v392, %v456
      %v480 = vsub.f32 %v395, %v456
      %v481 = vsub.f32 %v398, %v456
      %v482 = vsub.f32 %v401, %v456
      %v483 = vsub.f32 %v404, %v456
      %v484 = vsub.f32 %v407, %v456
      %v485 = vsub.f32 %v410, %v456
      %v486 = vsub.f32 %v413, %v456
      %v487 = vsub.f32 %v416, %v456
      %v488 = vsub.f32 %v419, %v456
      %v489 = vmul.f32 %v457, 1.442695
      %v490 = vpow.pop %v489
      %v491 = vmul.f32 %v458, 1.442695
      %v492 = vpow.pop %v491
      %v493 = vmul.f32 %v459, 1.442695
      %v494 = vpow.pop %v493
      %v495 = vmul.f32 %v460, 1.442695
      %v496 = vpow.pop %v495
      %v497 = vmul.f32 %v461, 1.442695
      %v498 = vpow.pop %v497
      %v499 = vmul.f32 %v462, 1.442695
      %v500 = vpow.pop %v499
      %v501 = vmul.f32 %v463, 1.442695
      %v502 = vpow.pop %v501
      %v503 = vmul.f32 %v464, 1.442695
      %v504 = vpow.pop %v503
      %v505 = vmul.f32 %v465, 1.442695
      %v506 = vpow.pop %v505
      %v507 = vmul.f32 %v466, 1.442695
      %v508 = vpow.pop %v507
      %v509 = vmul.f32 %v467, 1.442695
      %v510 = vpow.pop %v509
      %v511 = vmul.f32 %v468, 1.442695
      %v512 = vpow.pop %v511
      %v513 = vmul.f32 %v469, 1.442695
      %v514 = vpow.pop %v513
      %v515 = vmul.f32 %v470, 1.442695
      %v516 = vpow.pop %v515
      %v517 = vmul.f32 %v471, 1.442695
      %v518 = vpow.pop %v517
      %v519 = vmul.f32 %v472, 1.442695
      %v520 = vpow.pop %v519
      %v521 = vmul.f32 %v473, 1.442695
      %v522 = vpow.pop %v521
      %v523 = vmul.f32 %v474, 1.442695
      %v524 = vpow.pop %v523
      %v525 = vmul.f32 %v475, 1.442695
      %v526 = vpow.pop %v525
      %v527 = vmul.f32 %v476, 1.442695
      %v528 = vpow.pop %v527
      %v529 = vmul.f32 %v477, 1.442695
      %v530 = vpow.pop %v529
      %v531 = vmul.f32 %v478, 1.442695
      %v532 = vpow.pop %v531
      %v533 = vmul.f32 %v479, 1.442695
      %v534 = vpow.pop %v533
      %v535 = vmul.f32 %v480, 1.442695
      %v536 = vpow.pop %v535
      %v537 = vmul.f32 %v481, 1.442695
      %v538 = vpow.pop %v537
      %v539 = vmul.f32 %v482, 1.442695
      %v540 = vpow.pop %v539
      %v541 = vmul.f32 %v483, 1.442695
      %v542 = vpow.pop %v541
      %v543 = vmul.f32 %v484, 1.442695
      %v544 = vpow.pop %v543
      %v545 = vmul.f32 %v485, 1.442695
      %v546 = vpow.pop %v545
      %v547 = vmul.f32 %v486, 1.442695
      %v548 = vpow.pop %v547
      %v549 = vmul.f32 %v487, 1.442695
      %v550 = vpow.pop %v549
      %v551 = vmul.f32 %v488, 1.442695
      %v552 = vpow.pop %v551
      %v553 = vadd.f32 %v490, %v492
      %v554 = vadd.f32 %v553, %v494
      %v555 = vadd.f32 %v554, %v496
      %v556 = vadd.f32 %v555, %v498
      %v557 = vadd.f32 %v556, %v500
      %v558 = vadd.f32 %v557, %v502
      %v559 = vadd.f32 %v558, %v504
      %v560 = vadd.f32 %v559, %v506
      %v561 = vadd.f32 %v560, %v508
      %v562 = vadd.f32 %v561, %v510
      %v563 = vadd.f32 %v562, %v512
      %v564 = vadd.f32 %v563, %v514
      %v565 = vadd.f32 %v564, %v516
      %v566 = vadd.f32 %v565, %v518
      %v567 = vadd.f32 %v566, %v520
      %v568 = vadd.f32 %v567, %v522
      %v569 = vadd.f32 %v568, %v524
      %v570 = vadd.f32 %v569, %v526
      %v571 = vadd.f32 %v570, %v528
      %v572 = vadd.f32 %v571, %v530
      %v573 = vadd.f32 %v572, %v532
      %v574 = vadd.f32 %v573, %v534
      %v575 = vadd.f32 %v574, %v536
      %v576 = vadd.f32 %v575, %v538
      %v577 = vadd.f32 %v576, %v540
      %v578 = vadd.f32 %v577, %v542
      %v579 = vadd.f32 %v578, %v544
      %v580 = vadd.f32 %v579, %v546
      %v581 = vadd.f32 %v580, %v548
      %v582 = vadd.f32 %v581, %v550
      %v583 = vadd.f32 %v582, %v552
      %v584 = vrot.slane %v583, 4
      %v585 = vadd.f32 %v583, %v584
      %v586 = vrot.slane %v585, 2
      %v587 = vadd.f32 %v585, %v586
      %v588 = vrot.slane %v587, 1
      %v589 = vadd.f32 %v587, %v588
      %v590 = vmul.f32 %v252, %v490
      %v591 = vmul.f32 %v253, %v492
      %v592 = vmul.f32 %v254, %v494
      %v593 = vmul.f32 %v255, %v496
      %v594 = vmul.f32 %v256, %v498
      %v595 = vmul.f32 %v257, %v500
      %v596 = vmul.f32 %v258, %v502
      %v597 = vmul.f32 %v259, %v504
      %v598 = vmul.f32 %v260, %v506
      %v599 = vmul.f32 %v261, %v508
      %v600 = vmul.f32 %v262, %v510
      %v601 = vmul.f32 %v263, %v512
      %v602 = vmul.f32 %v264, %v514
      %v603 = vmul.f32 %v265, %v516
      %v604 = vmul.f32 %v266, %v518
      %v605 = vmul.f32 %v267, %v520
      %v606 = vmul.f32 %v268, %v522
      %v607 = vmul.f32 %v269, %v524
      %v608 = vmul.f32 %v270, %v526
      %v609 = vmul.f32 %v271, %v528
      %v610 = vmul.f32 %v272, %v530
      %v611 = vmul.f32 %v273, %v532
      %v612 = vmul.f32 %v274, %v534
      %v613 = vmul.f32 %v275, %v536
      %v614 = vmul.f32 %v276, %v538
      %v615 = vmul.f32 %v277, %v540
      %v616 = vmul.f32 %v278, %v542
      %v617 = vmul.f32 %v279, %v544
      %v618 = vmul.f32 %v280, %v546
      %v619 = vmul.f32 %v281, %v548
      %v620 = vmul.f32 %v282, %v550
      %v621 = vmul.f32 %v283, %v552
      %v622 = vsel %vm323, %v590, 0.0
      %v623 = vsel %vm323, %v591, 0.0
      %v624 = vadd.f32 %v622, %v623
      %v625 = vsel %vm323, %v592, 0.0
      %v626 = vadd.f32 %v624, %v625
      %v627 = vsel %vm323, %v593, 0.0
      %v628 = vadd.f32 %v626, %v627
      %v629 = vsel %vm323, %v594, 0.0
      %v630 = vadd.f32 %v628, %v629
      %v631 = vsel %vm323, %v595, 0.0
      %v632 = vadd.f32 %v630, %v631
      %v633 = vsel %vm323, %v596, 0.0
      %v634 = vadd.f32 %v632, %v633
      %v635 = vsel %vm323, %v597, 0.0
      %v636 = vadd.f32 %v634, %v635
      %v637 = vsel %vm323, %v598, 0.0
      %v638 = vadd.f32 %v636, %v637
      %v639 = vsel %vm323, %v599, 0.0
      %v640 = vadd.f32 %v638, %v639
      %v641 = vsel %vm323, %v600, 0.0
      %v642 = vadd.f32 %v640, %v641
      %v643 = vsel %vm323, %v601, 0.0
      %v644 = vadd.f32 %v642, %v643
      %v645 = vsel %vm323, %v602, 0.0
      %v646 = vadd.f32 %v644, %v645
      %v647 = vsel %vm323, %v603, 0.0
      %v648 = vadd.f32 %v646, %v647
      %v649 = vsel %vm323, %v604, 0.0
      %v650 = vadd.f32 %v648, %v649
      %v651 = vsel %vm323, %v605, 0.0
      %v652 = vadd.f32 %v650, %v651
      %v653 = vsel %vm323, %v606, 0.0
      %v654 = vadd.f32 %v652, %v653
      %v655 = vsel %vm323, %v607, 0.0
      %v656 = vadd.f32 %v654, %v655
      %v657 = vsel %vm323, %v608, 0.0
      %v658 = vadd.f32 %v656, %v657
      %v659 = vsel %vm323, %v609, 0.0
      %v660 = vadd.f32 %v658, %v659
      %v661 = vsel %vm323, %v610, 0.0
      %v662 = vadd.f32 %v660, %v661
      %v663 = vsel %vm323, %v611, 0.0
      %v664 = vadd.f32 %v662, %v663
      %v665 = vsel %vm323, %v612, 0.0
      %v666 = vadd.f32 %v664, %v665
      %v667 = vsel %vm323, %v613, 0.0
      %v668 = vadd.f32 %v666, %v667
      %v669 = vsel %vm323, %v614, 0.0
      %v670 = vadd.f32 %v668, %v669
      %v671 = vsel %vm323, %v615, 0.0
      %v672 = vadd.f32 %v670, %v671
      %v673 = vsel %vm323, %v616, 0.0
      %v674 = vadd.f32 %v672, %v673
      %v675 = vsel %vm323, %v617, 0.0
      %v676 = vadd.f32 %v674, %v675
      %v677 = vsel %vm323, %v618, 0.0
      %v678 = vadd.f32 %v676, %v677
      %v679 = vsel %vm323, %v619, 0.0
      %v680 = vadd.f32 %v678, %v679
      %v681 = vsel %vm323, %v620, 0.0
      %v682 = vadd.f32 %v680, %v681
      %v683 = vsel %vm323, %v621, 0.0
      %v684 = vadd.f32 %v682, %v683
      %v685 = vrot.slane %v684, 4
      %v686 = vadd.f32 %v684, %v685
      %v687 = vrot.slane %v686, 2
      %v688 = vadd.f32 %v686, %v687
      %v689 = vrot.slane %v688, 1
      %v690 = vadd.f32 %v688, %v689
      %v691 = vrcp.pop %v589
      %v692 = vmul.f32 %v690, %v691
      %v693 = vld [vmem:[%s3] sm:$0x7]
      %v694 = vld [vmem:[%s2] sm:$0xf]
      %v696 = vsel %vm323, %v692, 0
      %vm698 = vcmask 1043456
      %v700 = vsel %vm698, %v694, 0
      %702 = vmatprep.subr.mxu0 0.0
      %703 = vmatpush1.msra.mxu0 %v700
      %704 = vmatprep.subr.mxu0 0.0
      %705 = vmatpush1.msra.mxu0 0.0
      %706 = vmatprep.subr.mxu0 0.0
      %707 = vmatpush1.msra.mxu0 0.0
      %708 = vmatprep.subr.mxu0 0.0
      %709 = vmatpush1.msra.mxu0 0.0
      %710 = vmatprep.subr.mxu0 0.0
      %711 = vmatpush1.msra.mxu0 0.0
      %712 = vmatprep.subr.mxu0 0.0
      %713 = vmatpush1.msra.mxu0 0.0
      %714 = vmatprep.subr.mxu0 0.0
      %715 = vmatpush1.msra.mxu0 0.0
      %716 = vmatprep.subr.mxu0 0.0
      %717 = vmatpush1.msra.mxu0 0.0
      %718 = vmatprep.subr.mxu0 0.0
      %719 = vmatpush1.msra.mxu0 0.0
      %720 = vmatprep.subr.mxu0 0.0
      %721 = vmatpush1.msra.mxu0 0.0
      %722 = vmatprep.subr.mxu0 0.0
      %723 = vmatpush1.msra.mxu0 0.0
      %724 = vmatprep.subr.mxu0 0.0
      %725 = vmatpush1.msra.mxu0 0.0
      %726 = vmatprep.subr.mxu0 0.0
      %727 = vmatpush1.msra.mxu0 0.0
      %728 = vmatprep.subr.mxu0 0.0
      %729 = vmatpush1.msra.mxu0 0.0
      %730 = vmatprep.subr.mxu0 0.0
      %731 = vmatpush1.msra.mxu0 0.0
      %732 = vmatprep.subr.mxu0 0.0
      %733 = vmatpush1.msra.mxu0 0.0
      %734 = vmatprep.subr.mxu0 0.0
      %735 = vmatpush1.msra.mxu0 0.0
      %736 = vmatprep.subr.mxu0 0.0
      %737 = vmatpush1.msra.mxu0 0.0
      %738 = vmatprep.subr.mxu0 0.0
      %739 = vmatpush1.msra.mxu0 0.0
      %740 = vmatprep.subr.mxu0 0.0
      %741 = vmatpush1.msra.mxu0 0.0
      %742 = vmatprep.subr.mxu0 0.0
      %743 = vmatpush1.msra.mxu0 0.0
      %744 = vmatprep.subr.mxu0 0.0
      %745 = vmatpush1.msra.mxu0 0.0
      %746 = vmatprep.subr.mxu0 0.0
      %747 = vmatpush1.msra.mxu0 0.0
      %748 = vmatprep.subr.mxu0 0.0
      %749 = vmatpush1.msra.mxu0 0.0
      %750 = vmatprep.subr.mxu0 0.0
      %751 = vmatpush1.msra.mxu0 0.0
      %752 = vmatprep.subr.mxu0 0.0
      %753 = vmatpush1.msra.mxu0 0.0
      %754 = vmatprep.subr.mxu0 0.0
      %755 = vmatpush1.msra.mxu0 0.0
      %756 = vmatprep.subr.mxu0 0.0
      %757 = vmatpush1.msra.mxu0 0.0
      %758 = vmatprep.subr.mxu0 0.0
      %759 = vmatpush1.msra.mxu0 0.0
      %760 = vmatprep.subr.mxu0 0.0
      %761 = vmatpush1.msra.mxu0 0.0
      %762 = vmatprep.subr.mxu0 0.0
      %763 = vmatpush1.msra.mxu0 0.0
      %764 = vmatprep.subr.mxu0 0.0
      %765 = vmatpush1.msra.mxu0 0.0
      %766 = vmatprep.mubr.f32.mxu0 0.0
      %767 = vmatmul.mubr.f32.gmra.mrb[0].mxu0 %v696
      %v768 = vpop.f32.mrb[0].mxu0
      %v769 = vadd.f32 %v693, %v768
      %v770 = vpop.f32.mrb[0].mxu0
      %771 = vdwg.mxu0
      %773 = vrot.lane.b32.xlu0 %v769, 120
      %v774 = vpop.permute.xlu0 %773
      %v776 = vcombine.low %v769, %v774
      %v778 = vunpack.c.l.s4 1934713408
      %v779 = vunpack.c.0.s8 %v778
      %v780 = vlaneseq
      %v781 = vshrl.u32 %v780, 7
      %v782 = vsub.s32 %v779, %v781
      %v783 = vrot.slane %v776, %v782
      %vm784 = vcmask 58368
      %v785 = vsel %vm784, %v783, 0.0
      %786 = vadd.xlane.f32.xlu0 %v785
      %v787 = vpop.xlane.xlu0 %786
      %v788 = vrcp.pop 8.0
      %v789 = vmul.f32 %v787, %v788
      %v790 = vsub.f32 %v783, %v789
      %v791 = vmul.f32 %v790, %v790
      %v792 = vsel %vm784, %v791, 0.0
      %793 = vadd.xlane.f32.xlu0 %v792
      %v794 = vpop.xlane.xlu0 %793
      %v795 = vmul.f32 %v794, %v788
      %v796 = vadd.f32 %v795, 1e-05
      %v797 = vrsqrt.pop %v796
      %v798 = vmul.f32 %v790, %v797
      %v800 = vunpack.c.l.s4 1934713408
      %v801 = vunpack.c.0.s8 %v800
      %v802 = vlaneseq
      %v803 = vshrl.u32 %v802, 7
      %v804 = vsub.s32 %v801, %v803
      %v805 = vrot.slane %v798, %v804
      %v806 = vcombine.high %v805, 0.0
      %808 = vrot.lane.b32.xlu0 %v806, 8
      %v809 = vpop.permute.xlu0 %808
      %vm811 = vcmask 64512
      %v812 = vsel %vm811, %v805, %v809
      %v814 = vrot.slane %v693, 1
      %v816 = vmul.f32 %v812, %v814
      %v817 = vrot.slane %v693, 2
      %v819 = vadd.f32 %v816, %v817
      %v820 = vmax.f32 %v819, 0.0
      %v821 = vld [vmem:[%s4] sm:$0xff]
      %v822 = vld [vmem:[%s4 + $0x8] sm:$0xff]
      %v823 = vld [vmem:[%s5] sm:$0x1]
      %vm824 = vcmask 130048
      %v826 = vsel %vm824, %v820, 0
      %828 = vmatprep.subr.mxu0 0.0
      %829 = vmatpush1.msra.mxu0 %v821
      %830 = vmatprep.subr.mxu0 0.0
      %831 = vmatpush1.msra.mxu0 %v822
      %832 = vmatprep.subr.mxu0 0.0
      %833 = vmatpush1.msra.mxu0 0.0
      %834 = vmatprep.subr.mxu0 0.0
      %835 = vmatpush1.msra.mxu0 0.0
      %836 = vmatprep.subr.mxu0 0.0
      %837 = vmatpush1.msra.mxu0 0.0
      %838 = vmatprep.subr.mxu0 0.0
      %839 = vmatpush1.msra.mxu0 0.0
      %840 = vmatprep.subr.mxu0 0.0
      %841 = vmatpush1.msra.mxu0 0.0
      %842 = vmatprep.subr.mxu0 0.0
      %843 = vmatpush1.msra.mxu0 0.0
      %844 = vmatprep.subr.mxu0 0.0
      %845 = vmatpush1.msra.mxu0 0.0
      %846 = vmatprep.subr.mxu0 0.0
      %847 = vmatpush1.msra.mxu0 0.0
      %848 = vmatprep.subr.mxu0 0.0
      %849 = vmatpush1.msra.mxu0 0.0
      %850 = vmatprep.subr.mxu0 0.0
      %851 = vmatpush1.msra.mxu0 0.0
      %852 = vmatprep.subr.mxu0 0.0
      %853 = vmatpush1.msra.mxu0 0.0
      %854 = vmatprep.subr.mxu0 0.0
      %855 = vmatpush1.msra.mxu0 0.0
      %856 = vmatprep.subr.mxu0 0.0
      %857 = vmatpush1.msra.mxu0 0.0
      %858 = vmatprep.subr.mxu0 0.0
      %859 = vmatpush1.msra.mxu0 0.0
      %860 = vmatprep.subr.mxu0 0.0
      %861 = vmatpush1.msra.mxu0 0.0
      %862 = vmatprep.subr.mxu0 0.0
      %863 = vmatpush1.msra.mxu0 0.0
      %864 = vmatprep.subr.mxu0 0.0
      %865 = vmatpush1.msra.mxu0 0.0
      %866 = vmatprep.subr.mxu0 0.0
      %867 = vmatpush1.msra.mxu0 0.0
      %868 = vmatprep.subr.mxu0 0.0
      %869 = vmatpush1.msra.mxu0 0.0
      %870 = vmatprep.subr.mxu0 0.0
      %871 = vmatpush1.msra.mxu0 0.0
      %872 = vmatprep.subr.mxu0 0.0
      %873 = vmatpush1.msra.mxu0 0.0
      %874 = vmatprep.subr.mxu0 0.0
      %875 = vmatpush1.msra.mxu0 0.0
      %876 = vmatprep.subr.mxu0 0.0
      %877 = vmatpush1.msra.mxu0 0.0
      %878 = vmatprep.subr.mxu0 0.0
      %879 = vmatpush1.msra.mxu0 0.0
      %880 = vmatprep.subr.mxu0 0.0
      %881 = vmatpush1.msra.mxu0 0.0
      %882 = vmatprep.subr.mxu0 0.0
      %883 = vmatpush1.msra.mxu0 0.0
      %884 = vmatprep.subr.mxu0 0.0
      %885 = vmatpush1.msra.mxu0 0.0
      %886 = vmatprep.subr.mxu0 0.0
      %887 = vmatpush1.msra.mxu0 0.0
      %888 = vmatprep.subr.mxu0 0.0
      %889 = vmatpush1.msra.mxu0 0.0
      %890 = vmatprep.subr.mxu0 0.0
      %891 = vmatpush1.msra.mxu0 0.0
      %892 = vmatprep.mubr.f32.mxu0 0.0
      %893 = vmatmul.mubr.f32.gmra.mrb[0].mxu0 %v826
      %v894 = vpop.f32.mrb[0].mxu0
      %v895 = vadd.f32 %v823, %v894
      %v896 = vpop.f32.mrb[0].mxu0
      %897 = vdwg.mxu0
      %v898 = vxor.u32 %v895, 2147483648
      %v899 = vmul.f32 %v898, 1.442695
      %v900 = vpow.pop %v899
      %v901 = vadd.f32 %v900, 1.0
      %v902 = vrcp.pop %v901
      %v903 = vmul.f32 1.0, %v902
      %v904 = vlaneseq
      %v905 = vshrl.u32 %v904, 7
      %v906 = vsub.s32 0, %v905
      %v907 = vrot.slane %v903, %v906
      %909 = vrot.lane.b32.xlu0 %v907, 124
      %v910 = vpop.permute.xlu0 %909
      %v912 = vmul.f32 %v252, %v910
      %v913 = vmul.f32 %v253, %v910
      %v914 = vmul.f32 %v254, %v910
      %v915 = vmul.f32 %v255, %v910
      %v916 = vmul.f32 %v256, %v910
      %v917 = vmul.f32 %v257, %v910
      %v918 = vmul.f32 %v258, %v910
      %v919 = vmul.f32 %v259, %v910
      %v920 = vmul.f32 %v260, %v910
      %v921 = vmul.f32 %v261, %v910
      %v922 = vmul.f32 %v262, %v910
      %v923 = vmul.f32 %v263, %v910
      %v924 = vmul.f32 %v264, %v910
      %v925 = vmul.f32 %v265, %v910
      %v926 = vmul.f32 %v266, %v910
      %v927 = vmul.f32 %v267, %v910
      %v928 = vmul.f32 %v268, %v910
      %v929 = vmul.f32 %v269, %v910
      %v930 = vmul.f32 %v270, %v910
      %v931 = vmul.f32 %v271, %v910
      %v932 = vmul.f32 %v272, %v910
      %v933 = vmul.f32 %v273, %v910
      %v934 = vmul.f32 %v274, %v910
      %v935 = vmul.f32 %v275, %v910
      %v936 = vmul.f32 %v276, %v910
      %v937 = vmul.f32 %v277, %v910
      %v938 = vmul.f32 %v278, %v910
      %v939 = vmul.f32 %v279, %v910
      %v940 = vmul.f32 %v280, %v910
      %v941 = vmul.f32 %v281, %v910
      %v942 = vmul.f32 %v282, %v910
      %v943 = vmul.f32 %v283, %v910
      %v944 = vlaneseq
      %v945 = vshrl.u32 %v944, 7
      %v946 = vsub.s32 0, %v945
      %v947 = vrot.slane %v895, %v946
      %v948 = vadd.f32 %v912, %v947
      %v949 = vadd.f32 %v913, %v947
      %v950 = vadd.f32 %v914, %v947
      %v951 = vadd.f32 %v915, %v947
      %v952 = vadd.f32 %v916, %v947
      %v953 = vadd.f32 %v917, %v947
      %v954 = vadd.f32 %v918, %v947
      %v955 = vadd.f32 %v919, %v947
      %v956 = vadd.f32 %v920, %v947
      %v957 = vadd.f32 %v921, %v947
      %v958 = vadd.f32 %v922, %v947
      %v959 = vadd.f32 %v923, %v947
      %v960 = vadd.f32 %v924, %v947
      %v961 = vadd.f32 %v925, %v947
      %v962 = vadd.f32 %v926, %v947
      %v963 = vadd.f32 %v927, %v947
      %v964 = vadd.f32 %v928, %v947
      %v965 = vadd.f32 %v929, %v947
      %v966 = vadd.f32 %v930, %v947
      %v967 = vadd.f32 %v931, %v947
      %v968 = vadd.f32 %v932, %v947
      %v969 = vadd.f32 %v933, %v947
      %v970 = vadd.f32 %v934, %v947
      %v971 = vadd.f32 %v935, %v947
      %v972 = vadd.f32 %v936, %v947
      %v973 = vadd.f32 %v937, %v947
      %v974 = vadd.f32 %v938, %v947
      %v975 = vadd.f32 %v939, %v947
      %v976 = vadd.f32 %v940, %v947
      %v977 = vadd.f32 %v941, %v947
      %v978 = vadd.f32 %v942, %v947
      %v979 = vadd.f32 %v943, %v947
      %980 = vst.msk [vmem:[%s251] sm:$0xff] %vm323, %v948
      %981 = vst.msk [vmem:[%s251 + $0x8] sm:$0xff] %vm323, %v949
      %982 = vst.msk [vmem:[%s251 + $0x10] sm:$0xff] %vm323, %v950
      %983 = vst.msk [vmem:[%s251 + $0x18] sm:$0xff] %vm323, %v951
      %984 = vst.msk [vmem:[%s251 + $0x20] sm:$0xff] %vm323, %v952
      %985 = vst.msk [vmem:[%s251 + $0x28] sm:$0xff] %vm323, %v953
      %986 = vst.msk [vmem:[%s251 + $0x30] sm:$0xff] %vm323, %v954
      %987 = vst.msk [vmem:[%s251 + $0x38] sm:$0xff] %vm323, %v955
      %988 = vst.msk [vmem:[%s251 + $0x40] sm:$0xff] %vm323, %v956
      %989 = vst.msk [vmem:[%s251 + $0x48] sm:$0xff] %vm323, %v957
      %990 = vst.msk [vmem:[%s251 + $0x50] sm:$0xff] %vm323, %v958
      %991 = vst.msk [vmem:[%s251 + $0x58] sm:$0xff] %vm323, %v959
      %992 = vst.msk [vmem:[%s251 + $0x60] sm:$0xff] %vm323, %v960
      %993 = vst.msk [vmem:[%s251 + $0x68] sm:$0xff] %vm323, %v961
      %994 = vst.msk [vmem:[%s251 + $0x70] sm:$0xff] %vm323, %v962
      %995 = vst.msk [vmem:[%s251 + $0x78] sm:$0xff] %vm323, %v963
      %996 = vst.msk [vmem:[%s251 + $0x80] sm:$0xff] %vm323, %v964
      %997 = vst.msk [vmem:[%s251 + $0x88] sm:$0xff] %vm323, %v965
      %998 = vst.msk [vmem:[%s251 + $0x90] sm:$0xff] %vm323, %v966
      %999 = vst.msk [vmem:[%s251 + $0x98] sm:$0xff] %vm323, %v967
      %1000 = vst.msk [vmem:[%s251 + $0xa0] sm:$0xff] %vm323, %v968
      %1001 = vst.msk [vmem:[%s251 + $0xa8] sm:$0xff] %vm323, %v969
      %1002 = vst.msk [vmem:[%s251 + $0xb0] sm:$0xff] %vm323, %v970
      %1003 = vst.msk [vmem:[%s251 + $0xb8] sm:$0xff] %vm323, %v971
      %1004 = vst.msk [vmem:[%s251 + $0xc0] sm:$0xff] %vm323, %v972
      %1005 = vst.msk [vmem:[%s251 + $0xc8] sm:$0xff] %vm323, %v973
      %1006 = vst.msk [vmem:[%s251 + $0xd0] sm:$0xff] %vm323, %v974
      %1007 = vst.msk [vmem:[%s251 + $0xd8] sm:$0xff] %vm323, %v975
      %1008 = vst.msk [vmem:[%s251 + $0xe0] sm:$0xff] %vm323, %v976
      %1009 = vst.msk [vmem:[%s251 + $0xe8] sm:$0xff] %vm323, %v977
      %1010 = vst.msk [vmem:[%s251 + $0xf0] sm:$0xff] %vm323, %v978
      %1011 = vst.msk [vmem:[%s251 + $0xf8] sm:$0xff] %vm323, %v979
      %p1012 = scmp.lt.s32.totalorder %s17, 1
      %s1013 = scalar_select %p1012, %s17, 1
      %s1014 = smul.addr %s1013, 32
      %s1015 = smul.addr %s1014, 8
      %s1016 = scalar_lea.vmem %s6, %s1015
      // Predicated region
      $region45: #{tpu_custom_call.1} parent=43 // pred_check
        %p1017 = pneg %p166
      $region46: #{tpu_custom_call.1} parent=43 // pred_check_branch
        %1019 = sbr.rel (%p1017) target = $region48
      $region47: #{tpu_custom_call.1} parent=43 // pred_region
        _
      $region48: #{tpu_custom_call.1} parent=43 // pred_fallthru
        _
    $region44: #{tpu_custom_call.1} parent=5 // pred_fallthru
      _
    %p1020 = scmp.le.s32.totalorder 2, %s12
    // Predicated region
    $region49: #{tpu_custom_call.1} parent=5 // pred_check
      %p1021 = pneg %p1020
    $region50: #{tpu_custom_call.1} parent=5 // pred_check_branch
      %1023 = sbr.rel (%p1021) target = $region52
    $region51: #{tpu_custom_call.1} parent=5 // pred_region
      %s1024 = ssub.s32 %s12, 2
      // Predicated region
      $region53: #{tpu_custom_call.1} parent=51 // pred_check
        %p1025 = pneg %p172
      $region54: #{tpu_custom_call.1} parent=51 // pred_check_branch
        %1027 = sbr.rel (%p1025) target = $region56
      $region55: #{tpu_custom_call.1} parent=51 // pred_region
        %p1028 = scmp.lt.s32.totalorder %s18, 1
        %s1029 = scalar_select %p1028, %s18, 1
        %s1030 = smul.addr %s1029, 32
        %s1031 = smul.addr %s1030, 8
        %s1032 = scalar_lea.vmem %s6, %s1031
      $region56: #{tpu_custom_call.1} parent=51 // pred_fallthru
        _
    $region52: #{tpu_custom_call.1} parent=5 // pred_fallthru
      _
  $region6: #{tpu_custom_call.1} parent=0 // loop_footer
    %s16 = sadd.s32 1, %s12
  $region7: #{tpu_custom_call.1} parent=0 // loop_footer_branch
    %11 = sbr.rel target = $region3
  $region8: #{tpu_custom_call.1} parent=0 // loop_exit
    _

</llo_original>
